<compile_context>
chip_gen: v7x
topology: tpu7x:2x2x1
jax: 0.10.0
libtpu: 0.0.40
codegen_flags: <defaults>
</compile_context>

<pallas_src>
import jax
import jax.numpy as jnp
from jax import lax
from jax.experimental import pallas as pl
from jax.experimental.pallas import tpu as pltpu


def self_attention_kernel(x_ref, w_ref, b_ref, o_ref):
    x = x_ref[...]                      # (Gb, N, F_in)
    w = w_ref[...]                      # (F_in, F_out)
    b = b_ref[...]                      # (1, F_out)

    # Linear layer for the whole graph chunk as ONE MXU matmul: (Gb*N) rows
    # contract over F_in.  'gnf,fo->gno' has no batch dims, so Gb and N
    # collapse into the MXU row dimension without an explicit reshape.
    h = lax.dot_general(
        x, w,
        dimension_numbers=(((2,), (0,)), ((), ())),
        preferred_element_type=jnp.float32,
    ) + b                                                             # (Gb, N, F_out)

    # Attention scores per graph: batched NT contraction h @ h^T
    # (contracting dim is the feature axis of both operands -> no h^T tile
    # is materialized, no XLU transpose on the critical path).
    scores = lax.dot_general(
        h, h,
        dimension_numbers=(((2,), (2,)), ((0,), (0,))),
        preferred_element_type=jnp.float32,
    )                                                                 # (Gb, N, N)
    scores = jnp.tanh(scores)           # bounded in [-1, 1]

    # Softmax over the last axis.  |scores| <= 1 (tanh) => exp cannot
    # overflow, so the max-subtraction pass is dropped.  (Do NOT remove the
    # tanh above without restoring max-subtraction here.)
    e = jnp.exp(scores)                                               # (Gb, N, N)
    s = jnp.sum(e, axis=-1, keepdims=True)                            # (Gb, N, 1)

    # Deferred normalization: weighted sum with the *unnormalized* weights,
    # then divide at the (N, F_out) scale instead of multiplying the (N, N)
    # score matrix.  Exact divide (per-row denominators) for parity with the
    # PyTorch reference.
    u = lax.dot_general(
        e, h,
        dimension_numbers=(((2,), (1,)), ((0,), (0,))),
        preferred_element_type=jnp.float32,
    )                                                                 # (Gb, N, F_out)
    o_ref[...] = jnp.tanh(u / s).astype(o_ref.dtype)


def prepare_params(w, b):
    """Static-parameter prep — hoisted out of the per-call path (run once at init)."""
    w = jnp.asarray(w, jnp.float32)                 # (F_in, F_out)
    b = jnp.asarray(b, jnp.float32).reshape(1, -1)  # (1, F_out)
    return w, b


def self_attention(x, w, b, *, graphs_per_block=None):
    """x: (G, N, F_in) or (N, F_in); w: (F_in, F_out); b: (1, F_out)."""
    squeeze = (x.ndim == 2)
    if squeeze:
        x = x[None]
    x = x.astype(jnp.float32)
    G, N, f_in = x.shape
    f_out = w.shape[1]

    # Chunk size: batch as many graphs per grid step as possible while keeping
    # >= 2 steps (marked "parallel") so both v7x TensorCores get work.  On
    # v5e/v6e (1 TC) the extra step is negligible.
    if graphs_per_block is None:
        graphs_per_block = max(1, (G + 1) // 2)
    gb = max(1, min(graphs_per_block, G))
    g_pad = ((G + gb - 1) // gb) * gb
    if g_pad != G:
        # Zero-filled padding graphs produce finite garbage (sliced off below);
        # no NaN/Inf risk since exp(tanh(.)) row sums are strictly positive.
        x = jnp.pad(x, ((0, g_pad - G), (0, 0), (0, 0)))

    out = pl.pallas_call(
        self_attention_kernel,
        out_shape=jax.ShapeDtypeStruct((g_pad, N, f_out), jnp.float32),
        grid=(g_pad // gb,),
        in_specs=[
            # Last two block dims equal the full array dims -> legal without
            # (8,128) padding; no feature-axis zero-padding needed.
            pl.BlockSpec((gb, N, f_in), lambda g: (g, 0, 0)),
            pl.BlockSpec((f_in, f_out), lambda g: (0, 0)),
            pl.BlockSpec((1, f_out), lambda g: (0, 0)),
        ],
        out_specs=pl.BlockSpec((gb, N, f_out), lambda g: (g, 0, 0)),
        compiler_params=pltpu.CompilerParams(
            dimension_semantics=("parallel",),
        ),
    )(x, w, b)

    out = out[:G]
    return out[0] if squeeze else out


def _reference(x, w, b):
    h = x @ w + b
    s = jnp.tanh(h @ h.T)
    att = jax.nn.softmax(s, axis=1)
    return jnp.tanh(att @ h)


if __name__ == "__main__":
    # Small shapes consistent with the module: G independent graphs of N nodes.
    G, N, F_IN, F_OUT = 4, 8, 32, 16

    key = jax.random.PRNGKey(0)
    kx, kw, kb = jax.random.split(key, 3)

    x = jax.random.normal(kx, (G, N, F_IN), dtype=jnp.float32)
    # Deterministic Linear params (Kaiming-uniform-ish scale, exact values irrelevant).
    w_raw = jax.random.uniform(kw, (F_IN, F_OUT), dtype=jnp.float32,
                               minval=-1.0 / jnp.sqrt(F_IN), maxval=1.0 / jnp.sqrt(F_IN))
    b_raw = jax.random.uniform(kb, (1, F_OUT), dtype=jnp.float32,
                               minval=-1.0 / jnp.sqrt(F_IN), maxval=1.0 / jnp.sqrt(F_IN))

    # Static-parameter prep done once (not per forward call).
    w, b = prepare_params(w_raw, b_raw)

    # Batched path: 2 grid steps of 2 graphs each ("parallel" -> both v7x TCs).
    out = jax.block_until_ready(self_attention(x, w, b))
    ref = jax.vmap(lambda xg: _reference(xg, w, b))(x)
    assert out.shape == (G, N, F_OUT)
    assert jnp.allclose(out, ref, atol=1e-4, rtol=1e-4), "batched mismatch vs JAX reference"

    # Single-graph path (matches the original module's (N, F_in) signature).
    out1 = jax.block_until_ready(self_attention(x[0], w, b))
    ref1 = _reference(x[0], w, b)
    assert out1.shape == (N, F_OUT)
    assert jnp.allclose(out1, ref1, atol=1e-4, rtol=1e-4), "single-graph mismatch vs JAX reference"

    print("KERNEL_OK")
</pallas_src>

<mosaic_0001>
module attributes {stable_mosaic.version = 11 : i64} {
  func.func @self_attention_kernel(%arg0: i32, %arg1: memref<2x8x32xf32, #tpu.memory_space<vmem>>, %arg2: memref<32x16xf32, #tpu.memory_space<vmem>>, %arg3: memref<1x16xf32, #tpu.memory_space<vmem>>, %arg4: memref<2x8x16xf32, #tpu.memory_space<vmem>>) attributes {dimension_semantics = [#tpu.dimension_semantics<parallel>], iteration_bounds = array<i64: 2>, scalar_prefetch = 0 : i64, scratch_operands = 0 : i64, tpu.core_type = #tpu.core_type<tc>, window_params = [{transform_indices = @transform_0, window_bounds = array<i64: 2, 8, 32>}, {pipeline_mode = #tpu.pipeline_mode<synchronous>, transform_indices = @transform_1, window_bounds = array<i64: 32, 16>}, {pipeline_mode = #tpu.pipeline_mode<synchronous>, transform_indices = @transform_2, window_bounds = array<i64: 1, 16>}, {transform_indices = @transform_3, window_bounds = array<i64: 2, 8, 16>}]} {
    %c0 = arith.constant 0 : index
    %c0_0 = arith.constant 0 : index
    %c0_1 = arith.constant 0 : index
    %0 = vector.load %arg1[%c0, %c0_0, %c0_1] : memref<2x8x32xf32, #tpu.memory_space<vmem>>, vector<2x8x32xf32>
    %c0_2 = arith.constant 0 : index
    %c0_3 = arith.constant 0 : index
    %1 = vector.load %arg2[%c0_2, %c0_3] : memref<32x16xf32, #tpu.memory_space<vmem>>, vector<32x16xf32>
    %c0_4 = arith.constant 0 : index
    %c0_5 = arith.constant 0 : index
    %2 = vector.load %arg3[%c0_4, %c0_5] : memref<1x16xf32, #tpu.memory_space<vmem>>, vector<1x16xf32>
    %cst = arith.constant dense<0.000000e+00> : vector<2x8x16xf32>
    %3 = tpu.matmul %0, %1, %cst {dimension_numbers = #tpu.dot_dimension_numbers<[2], [0], [0, 1], [1], [0, 0, 0, 1, 1, 1], [], []>} : vector<2x8x32xf32>, vector<32x16xf32>, vector<2x8x16xf32> -> vector<2x8x16xf32>
    %4 = vector.shape_cast %2 : vector<1x16xf32> to vector<1x1x16xf32>
    %5 = vector.broadcast %4 : vector<1x1x16xf32> to vector<2x8x16xf32>
    %6 = arith.addf %3, %5 : vector<2x8x16xf32>
    %cst_6 = arith.constant dense<0.000000e+00> : vector<2x8x8xf32>
    %7 = tpu.matmul %6, %6, %cst_6 {dimension_numbers = #tpu.dot_dimension_numbers<[2], [2], [1], [1], [0, 0, 0, 1, 1, 1], [0], [0]>} : vector<2x8x16xf32>, vector<2x8x16xf32>, vector<2x8x8xf32> -> vector<2x8x8xf32>
    %8 = math.tanh %7 : vector<2x8x8xf32>
    %9 = math.exp %8 : vector<2x8x8xf32>
    %cst_7 = arith.constant dense<0.000000e+00> : vector<2x8xf32>
    %10 = vector.multi_reduction <add>, %9, %cst_7 [2] : vector<2x8x8xf32> to vector<2x8xf32>
    %11 = vector.shape_cast %10 : vector<2x8xf32> to vector<2x8x1xf32>
    %cst_8 = arith.constant dense<0.000000e+00> : vector<2x8x16xf32>
    %12 = tpu.matmul %9, %6, %cst_8 {dimension_numbers = #tpu.dot_dimension_numbers<[2], [1], [1], [2], [0, 0, 0, 1, 1, 2], [0], [0]>} : vector<2x8x8xf32>, vector<2x8x16xf32>, vector<2x8x16xf32> -> vector<2x8x16xf32>
    %13 = vector.broadcast %11 : vector<2x8x1xf32> to vector<2x8x16xf32>
    %14 = arith.divf %12, %13 : vector<2x8x16xf32>
    %15 = math.tanh %14 : vector<2x8x16xf32>
    %c0_9 = arith.constant 0 : index
    %c0_10 = arith.constant 0 : index
    %c0_11 = arith.constant 0 : index
    %16 = vector.load %arg4[%c0_9, %c0_10, %c0_11] : memref<2x8x16xf32, #tpu.memory_space<vmem>>, vector<2x8x16xf32>
    tpu.vector_store %arg4[%c0_9, %c0_10, %c0_11], %15 {strides = array<i32>} : memref<2x8x16xf32, #tpu.memory_space<vmem>>, vector<2x8x16xf32>,
    return
  }
  func.func @transform_0(%arg0: i32) -> (i32, i32, i32) {
    %c0_i32 = arith.constant 0 : i32
    %c0_i32_0 = arith.constant 0 : i32
    %c0_i32_1 = arith.constant 0 : i32
    return %arg0, %c0_i32, %c0_i32_0 : i32, i32, i32
  }
  func.func @transform_1(%arg0: i32) -> (i32, i32) {
    %c0_i32 = arith.constant 0 : i32
    %c0_i32_0 = arith.constant 0 : i32
    %c0_i32_1 = arith.constant 0 : i32
    return %c0_i32, %c0_i32_0 : i32, i32
  }
  func.func @transform_2(%arg0: i32) -> (i32, i32) {
    %c0_i32 = arith.constant 0 : i32
    %c0_i32_0 = arith.constant 0 : i32
    %c0_i32_1 = arith.constant 0 : i32
    return %c0_i32, %c0_i32_0 : i32, i32
  }
  func.func @transform_3(%arg0: i32) -> (i32, i32, i32) {
    %c0_i32 = arith.constant 0 : i32
    %c0_i32_0 = arith.constant 0 : i32
    %c0_i32_1 = arith.constant 0 : i32
    return %arg0, %c0_i32, %c0_i32_0 : i32, i32, i32
  }
}

</mosaic_0001>

<llo_original>
// kernel: tpu_custom_call.1
$region0: #{tpu_custom_call.1}
  #allocation0 [shape = 'u32[]', space=smem, size = 0x4, offset = 0x4, fixed_abs, tag = 'smem constant byte address 0x4 - core index']
  #allocation1 [shape = 'u32[144,128]{1,0:T(1,128)}', space=vmem, size = 0x12000, scoped, tag = 'internal scratch']
  %s0 = inlined_call_operand.vmem [shape: f32[4,8,32], index: 0, kind: input, shape index: {}]
  %s1 = inlined_call_operand.vmem [shape: f32[32,16], index: 1, kind: input, shape index: {}]
  %s2 = inlined_call_operand.vmem [shape: f32[1,16], index: 2, kind: input, shape index: {}]
  %s3 = inlined_call_operand.hbm [shape: f32[4,8,16], index: 3, kind: output, shape index: {}]
  %s4 = sld [smem:[#allocation0]]
  $region45: #{tpu_custom_call.1} parent=0
    _
  %s6 = ssub.s32 1, %s4
  %s7 = scalar_select 0, %s6, %s4
  $region1: #{tpu_custom_call.1} parent=0
    #allocation2 [shape = 'u8[16384]{0}', space=vmem, size = 0x4000, scoped, tag = 'output window, operand 0']
    #allocation3 [shape = 's32[2]{0}', space=sflag, size = 0x8, scoped, tag = 'scoped memory for tpu_custom_call.1']
    %8 = vsyncpa [#allocation3], 0
    %s9 = scalar_lea.sflag [#allocation3], 1
    %10 = vsyncpa %s9, 0
    loop: start=0, step=1, limit=4
    $region2: #{tpu_custom_call.1} parent=1 // loop_pre_header
      _
    $region3: #{tpu_custom_call.1} parent=1 // loop_header
      %s12 = sphi 0, %s16
      %p13 = scmp.ge.s32.totalorder %s12, 4
      %s22 = sphi 0, %s24
      %s25 = sphi 0, %s22
      %s26 = sphi 0, %s25
      %s42 = sphi 0, %s26
      %s46 = sphi 0, %s46
      %s48 = sphi 0, %s46
      %s49 = sphi 0, %s48
      %s63 = sphi 0, %s49
      %s67 = sphi 0, %s67
      %s69 = sphi 0, %s67
      %s70 = sphi 0, %s69
      %s84 = sphi 0, %s70
      %s90 = sphi 0, %s92
      %s93 = sphi 0, %s90
      %s94 = sphi 0, %s93
      %s110 = sphi 0, %s94
    $region4: #{tpu_custom_call.1} parent=1 // loop_header_branch
      %15 = sbr.rel (%p13) target = $region8
    $region5: #{tpu_custom_call.1} parent=1 // loop_body
      %s17 = ssub.s32 %s12, 1
      %s18 = ssub.s32 %s12, 2
      %s19 = sadd.s32 %s12, 1
      %s20 = ssub.s32 %s12, %s19
      %p21 = scmp.eq.s32.totalorder %s20, 0
      %s23 = sadd.s32 %s22, 1
      %s24 = scalar_select %p21, %s22, %s23
      %p27 = pneg %p21
      %p28 = scmp.eq.s32.totalorder %s12, 1
      %p29 = por %p27, %p28
      %p30 = scmp.ne.s32.totalorder %s22, %s25
      %p31 = scmp.eq.s32.totalorder %s12, 0
      %p32 = por %p30, %p31
      %p33 = scmp.ne.s32.totalorder %s22, %s25
      %p34 = scmp.eq.s32.totalorder %s17, 1
      %p35 = por %p33, %p34
      %p36 = scmp.ne.s32.totalorder %s25, %s26
      %p37 = scmp.eq.s32.totalorder %s17, 0
      %p38 = por %p36, %p37
      %p39 = scmp.ne.s32.totalorder %s25, %s26
      %p40 = scmp.eq.s32.totalorder %s18, 1
      %p41 = por %p39, %p40
      %p43 = scmp.ne.s32.totalorder %s26, %s42
      %p44 = scmp.eq.s32.totalorder %s18, 0
      %p45 = por %p43, %p44
      %s47 = sadd.s32 %s46, 1
      %p50 = scmp.eq.s32.totalorder %s12, 1
      %p51 = scmp.ne.s32.totalorder %s46, %s48
      %p52 = scmp.eq.s32.totalorder %s12, 0
      %p53 = por %p51, %p52
      %p54 = scmp.ne.s32.totalorder %s46, %s48
      %p55 = scmp.eq.s32.totalorder %s17, 1
      %p56 = por %p54, %p55
      %p57 = scmp.ne.s32.totalorder %s48, %s49
      %p58 = scmp.eq.s32.totalorder %s17, 0
      %p59 = por %p57, %p58
      %p60 = scmp.ne.s32.totalorder %s48, %s49
      %p61 = scmp.eq.s32.totalorder %s18, 1
      %p62 = por %p60, %p61
      %p64 = scmp.ne.s32.totalorder %s49, %s63
      %p65 = scmp.eq.s32.totalorder %s18, 0
      %p66 = por %p64, %p65
      %s68 = sadd.s32 %s67, 1
      %p71 = scmp.eq.s32.totalorder %s12, 1
      %p72 = scmp.ne.s32.totalorder %s67, %s69
      %p73 = scmp.eq.s32.totalorder %s12, 0
      %p74 = por %p72, %p73
      %p75 = scmp.ne.s32.totalorder %s67, %s69
      %p76 = scmp.eq.s32.totalorder %s17, 1
      %p77 = por %p75, %p76
      %p78 = scmp.ne.s32.totalorder %s69, %s70
      %p79 = scmp.eq.s32.totalorder %s17, 0
      %p80 = por %p78, %p79
      %p81 = scmp.ne.s32.totalorder %s69, %s70
      %p82 = scmp.eq.s32.totalorder %s18, 1
      %p83 = por %p81, %p82
      %p85 = scmp.ne.s32.totalorder %s70, %s84
      %p86 = scmp.eq.s32.totalorder %s18, 0
      %p87 = por %p85, %p86
      %s88 = ssub.s32 %s12, %s19
      %p89 = scmp.eq.s32.totalorder %s88, 0
      %s91 = sadd.s32 %s90, 1
      %s92 = scalar_select %p89, %s90, %s91
      %p95 = pneg %p89
      %p96 = scmp.eq.s32.totalorder %s12, 1
      %p97 = por %p95, %p96
      %p98 = scmp.ne.s32.totalorder %s90, %s93
      %p99 = scmp.eq.s32.totalorder %s12, 0
      %p100 = por %p98, %p99
      %p101 = scmp.ne.s32.totalorder %s90, %s93
      %p102 = scmp.eq.s32.totalorder %s17, 1
      %p103 = por %p101, %p102
      %p104 = scmp.ne.s32.totalorder %s93, %s94
      %p105 = scmp.eq.s32.totalorder %s17, 0
      %p106 = por %p104, %p105
      %p107 = scmp.ne.s32.totalorder %s93, %s94
      %p108 = scmp.eq.s32.totalorder %s18, 1
      %p109 = por %p107, %p108
      %p111 = scmp.ne.s32.totalorder %s94, %s110
      %p112 = scmp.eq.s32.totalorder %s18, 0
      %p113 = por %p111, %p112
      %p114 = scmp.le.s32.totalorder 1, %s12
      %p115 = scmp.lt.s32.totalorder %s12, 3
      %p116 = pnand %p114, %p115
      %p117 = pneg %p116
      // Predicated region
      $region9: #{tpu_custom_call.1} parent=5 // pred_check
        _
      $region10: #{tpu_custom_call.1} parent=5 // pred_check_branch
        %119 = sbr.rel (%p116) target = $region12
      $region11: #{tpu_custom_call.1} parent=5 // pred_region
        %s120 = ssub.s32 %s12, 1
        // Predicated region
        $region13: #{tpu_custom_call.1} parent=11 // pred_check
          %p121 = pneg %p59
        $region14: #{tpu_custom_call.1} parent=11 // pred_check_branch
          %123 = sbr.rel (%p121) target = $region16
        $region15: #{tpu_custom_call.1} parent=11 // pred_region
          _
        $region16: #{tpu_custom_call.1} parent=11 // pred_fallthru
          _
        // Predicated region
        $region17: #{tpu_custom_call.1} parent=11 // pred_check
          %p124 = pneg %p80
        $region18: #{tpu_custom_call.1} parent=11 // pred_check_branch
          %126 = sbr.rel (%p124) target = $region20
        $region19: #{tpu_custom_call.1} parent=11 // pred_region
          _
        $region20: #{tpu_custom_call.1} parent=11 // pred_fallthru
          _
      $region12: #{tpu_custom_call.1} parent=5 // pred_fallthru
        _
      %p127 = scmp.lt.s32.totalorder %s12, 2
      // Predicated region
      $region21: #{tpu_custom_call.1} parent=5 // pred_check
        %p128 = pneg %p127
      $region22: #{tpu_custom_call.1} parent=5 // pred_check_branch
        %130 = sbr.rel (%p128) target = $region24
      $region23: #{tpu_custom_call.1} parent=5 // pred_region
        // Predicated region
        $region25: #{tpu_custom_call.1} parent=23 // pred_check
          %p131 = pneg %p32
        $region26: #{tpu_custom_call.1} parent=23 // pred_check_branch
          %133 = sbr.rel (%p131) target = $region28
        $region27: #{tpu_custom_call.1} parent=23 // pred_region
          %s134 = smul.u32 2, %s12
          %p135 = scmp.lt.s32.totalorder %s134, 3
          %s136 = scalar_select %p135, %s134, 3
          %s137 = smul.addr %s136, 8
          %s138 = scalar_lea.vmem %s0, %s137
          %s139 = smul.u32 2, %s12
        $region28: #{tpu_custom_call.1} parent=23 // pred_fallthru
          _
      $region24: #{tpu_custom_call.1} parent=5 // pred_fallthru
        _
      %p140 = scmp.le.s32.totalorder 1, %s12
      %p141 = scmp.lt.s32.totalorder %s12, 3
      %p142 = pnand %p140, %p141
      %p143 = pneg %p142
      // Predicated region
      $region29: #{tpu_custom_call.1} parent=5 // pred_check
        _
      $region30: #{tpu_custom_call.1} parent=5 // pred_check_branch
        %145 = sbr.rel (%p142) target = $region32
      $region31: #{tpu_custom_call.1} parent=5 // pred_region
        %s146 = ssub.s32 %s12, 1
        %s147 = smul.u32 2, %s17
        %p148 = scmp.lt.s32.totalorder %s147, 3
        %s149 = scalar_select %p148, %s147, 3
        %s150 = smul.addr %s149, 8
        %s151 = scalar_lea.vmem %s0, %s150
        %p152 = pneg %p38
        %p153 = pneg %p35
        %p154 = pneg %p59
        %p155 = pneg %p56
        %p156 = pneg %p80
        %p157 = pneg %p77
        %p158 = pneg %p106
        %p159 = pneg %p103
        %s160 = sand.u32 %s93, 1
        %s161 = scalar_lea.sflag [#allocation3], %s160
        %s162 = sand.u32 %s93, 1
        %s163 = smul.addr %s162, 16
        %s164 = scalar_lea.vmem [#allocation2], %s163
        %s165 = smul.u32 2, %s17
        %p166 = scmp.lt.s32.totalorder %s165, 3
        %s167 = scalar_select %p166, %s165, 3
        %s168 = smul.addr %s167, 8
        %s169 = scalar_lea.vmem %s0, %s168
        %s170 = smul.u32 2, %s17
        %s171 = smul.u32 2, %s17
        %v172 = vld [vmem:[%s169] sm:$0xff]
        %v173 = vld [vmem:[%s169 + $0x8] sm:$0xff]
        %v174 = vld [vmem:[%s1] sm:$0xff]
        %v175 = vld [vmem:[%s1 + $0x8] sm:$0xff]
        %v176 = vld [vmem:[%s1 + $0x10] sm:$0xff]
        %v177 = vld [vmem:[%s1 + $0x18] sm:$0xff]
        %v178 = vld [vmem:[%s2] sm:$0x1]
        %v180 = vlaneseq
        %v181 = vshrl.u32 %v180, 7
        %v182 = vsub.s32 0, %v181
        %v183 = vrot.slane %v178, %v182
        %vm185 = vcmask 261120
        %v187 = vsel %vm185, %v172, 0
        %v190 = vsel %vm185, %v173, 0
        %192 = vmatprep.subr.mxu0 0.0
        %193 = vmatpush1.msra.mxu0 %v174
        %194 = vmatprep.subr.mxu0 0.0
        %195 = vmatpush1.msra.mxu0 %v175
        %196 = vmatprep.subr.mxu0 0.0
        %197 = vmatpush1.msra.mxu0 %v176
        %198 = vmatprep.subr.mxu0 0.0
        %199 = vmatpush1.msra.mxu0 %v177
        %200 = vmatprep.subr.mxu0 0.0
        %201 = vmatpush1.msra.mxu0 0.0
        %202 = vmatprep.subr.mxu0 0.0
        %203 = vmatpush1.msra.mxu0 0.0
        %204 = vmatprep.subr.mxu0 0.0
        %205 = vmatpush1.msra.mxu0 0.0
        %206 = vmatprep.subr.mxu0 0.0
        %207 = vmatpush1.msra.mxu0 0.0
        %208 = vmatprep.subr.mxu0 0.0
        %209 = vmatpush1.msra.mxu0 0.0
        %210 = vmatprep.subr.mxu0 0.0
        %211 = vmatpush1.msra.mxu0 0.0
        %212 = vmatprep.subr.mxu0 0.0
        %213 = vmatpush1.msra.mxu0 0.0
        %214 = vmatprep.subr.mxu0 0.0
        %215 = vmatpush1.msra.mxu0 0.0
        %216 = vmatprep.subr.mxu0 0.0
        %217 = vmatpush1.msra.mxu0 0.0
        %218 = vmatprep.subr.mxu0 0.0
        %219 = vmatpush1.msra.mxu0 0.0
        %220 = vmatprep.subr.mxu0 0.0
        %221 = vmatpush1.msra.mxu0 0.0
        %222 = vmatprep.subr.mxu0 0.0
        %223 = vmatpush1.msra.mxu0 0.0
        %224 = vmatprep.subr.mxu0 0.0
        %225 = vmatpush1.msra.mxu0 0.0
        %226 = vmatprep.subr.mxu0 0.0
        %227 = vmatpush1.msra.mxu0 0.0
        %228 = vmatprep.subr.mxu0 0.0
        %229 = vmatpush1.msra.mxu0 0.0
        %230 = vmatprep.subr.mxu0 0.0
        %231 = vmatpush1.msra.mxu0 0.0
        %232 = vmatprep.subr.mxu0 0.0
        %233 = vmatpush1.msra.mxu0 0.0
        %234 = vmatprep.subr.mxu0 0.0
        %235 = vmatpush1.msra.mxu0 0.0
        %236 = vmatprep.subr.mxu0 0.0
        %237 = vmatpush1.msra.mxu0 0.0
        %238 = vmatprep.subr.mxu0 0.0
        %239 = vmatpush1.msra.mxu0 0.0
        %240 = vmatprep.subr.mxu0 0.0
        %241 = vmatpush1.msra.mxu0 0.0
        %242 = vmatprep.subr.mxu0 0.0
        %243 = vmatpush1.msra.mxu0 0.0
        %244 = vmatprep.subr.mxu0 0.0
        %245 = vmatpush1.msra.mxu0 0.0
        %246 = vmatprep.subr.mxu0 0.0
        %247 = vmatpush1.msra.mxu0 0.0
        %248 = vmatprep.subr.mxu0 0.0
        %249 = vmatpush1.msra.mxu0 0.0
        %250 = vmatprep.subr.mxu0 0.0
        %251 = vmatpush1.msra.mxu0 0.0
        %252 = vmatprep.subr.mxu0 0.0
        %253 = vmatpush1.msra.mxu0 0.0
        %254 = vmatprep.subr.mxu0 0.0
        %255 = vmatpush1.msra.mxu0 0.0
        %256 = vmatprep.mubr.f32.mxu0 0.0
        %257 = vmatmul.mubr.f32.gmra.mrb[0].mxu0 %v187
        %v258 = vpop.f32.mrb[0].mxu0
        %v259 = vadd.f32 %v183, %v258
        %v260 = vpop.f32.mrb[0].mxu0
        %261 = vmatprep.mubr.f32.mxu0 0.0
        %262 = vmatmul.mubr.f32.gmra.mrb[0].mxu0 %v190
        %v263 = vpop.f32.mrb[0].mxu0
        %v264 = vadd.f32 %v183, %v263
        %v265 = vpop.f32.mrb[0].mxu0
        %266 = vdwg.mxu0
        %vm267 = vcmask 130048
        %v269 = vsel %vm267, %v259, 0
        %271 = vmatprep.subr.mxu0 0.0
        %272 = vmatpush1.xpose.msra.mxu0 %v269
        %273 = vmatprep.subr.mxu0 0.0
        %274 = vmatpush1.xpose.msra.mxu0 0.0
        %275 = vmatprep.subr.mxu0 0.0
        %276 = vmatpush1.xpose.msra.mxu0 0.0
        %277 = vmatprep.subr.mxu0 0.0
        %278 = vmatpush1.xpose.msra.mxu0 0.0
        %279 = vmatprep.subr.mxu0 0.0
        %280 = vmatpush1.xpose.msra.mxu0 0.0
        %281 = vmatprep.subr.mxu0 0.0
        %282 = vmatpush1.xpose.msra.mxu0 0.0
        %283 = vmatprep.subr.mxu0 0.0
        %284 = vmatpush1.xpose.msra.mxu0 0.0
        %285 = vmatprep.subr.mxu0 0.0
        %286 = vmatpush1.xpose.msra.mxu0 0.0
        %287 = vmatprep.subr.mxu0 0.0
        %288 = vmatpush1.xpose.msra.mxu0 0.0
        %289 = vmatprep.subr.mxu0 0.0
        %290 = vmatpush1.xpose.msra.mxu0 0.0
        %291 = vmatprep.subr.mxu0 0.0
        %292 = vmatpush1.xpose.msra.mxu0 0.0
        %293 = vmatprep.subr.mxu0 0.0
        %294 = vmatpush1.xpose.msra.mxu0 0.0
        %295 = vmatprep.subr.mxu0 0.0
        %296 = vmatpush1.xpose.msra.mxu0 0.0
        %297 = vmatprep.subr.mxu0 0.0
        %298 = vmatpush1.xpose.msra.mxu0 0.0
        %299 = vmatprep.subr.mxu0 0.0
        %300 = vmatpush1.xpose.msra.mxu0 0.0
        %301 = vmatprep.subr.mxu0 0.0
        %302 = vmatpush1.xpose.msra.mxu0 0.0
        %303 = vmatprep.subr.mxu0 0.0
        %304 = vmatpush1.xpose.msra.mxu0 0.0
        %305 = vmatprep.subr.mxu0 0.0
        %306 = vmatpush1.xpose.msra.mxu0 0.0
        %307 = vmatprep.subr.mxu0 0.0
        %308 = vmatpush1.xpose.msra.mxu0 0.0
        %309 = vmatprep.subr.mxu0 0.0
        %310 = vmatpush1.xpose.msra.mxu0 0.0
        %311 = vmatprep.subr.mxu0 0.0
        %312 = vmatpush1.xpose.msra.mxu0 0.0
        %313 = vmatprep.subr.mxu0 0.0
        %314 = vmatpush1.xpose.msra.mxu0 0.0
        %315 = vmatprep.subr.mxu0 0.0
        %316 = vmatpush1.xpose.msra.mxu0 0.0
        %317 = vmatprep.subr.mxu0 0.0
        %318 = vmatpush1.xpose.msra.mxu0 0.0
        %319 = vmatprep.subr.mxu0 0.0
        %320 = vmatpush1.xpose.msra.mxu0 0.0
        %321 = vmatprep.subr.mxu0 0.0
        %322 = vmatpush1.xpose.msra.mxu0 0.0
        %323 = vmatprep.subr.mxu0 0.0
        %324 = vmatpush1.xpose.msra.mxu0 0.0
        %325 = vmatprep.subr.mxu0 0.0
        %326 = vmatpush1.xpose.msra.mxu0 0.0
        %327 = vmatprep.subr.mxu0 0.0
        %328 = vmatpush1.xpose.msra.mxu0 0.0
        %329 = vmatprep.subr.mxu0 0.0
        %330 = vmatpush1.xpose.msra.mxu0 0.0
        %331 = vmatprep.subr.mxu0 0.0
        %332 = vmatpush1.xpose.msra.mxu0 0.0
        %333 = vmatprep.subr.mxu0 0.0
        %334 = vmatpush1.xpose.msra.mxu0 0.0
        %335 = vmatprep.mubr.f32.mxu0 0.0
        %336 = vmatmul.mubr.f32.gmra.mrb[0].mxu0 %v269
        %v337 = vpop.f32.mrb[0].mxu0
        %v338 = vadd.f32 0.0, %v337
        %v339 = vpop.f32.mrb[0].mxu0
        %340 = vdwg.mxu0
        %v342 = vsel %vm267, %v264, 0
        %344 = vmatprep.subr.mxu0 0.0
        %345 = vmatpush1.xpose.msra.mxu0 %v342
        %346 = vmatprep.subr.mxu0 0.0
        %347 = vmatpush1.xpose.msra.mxu0 0.0
        %348 = vmatprep.subr.mxu0 0.0
        %349 = vmatpush1.xpose.msra.mxu0 0.0
        %350 = vmatprep.subr.mxu0 0.0
        %351 = vmatpush1.xpose.msra.mxu0 0.0
        %352 = vmatprep.subr.mxu0 0.0
        %353 = vmatpush1.xpose.msra.mxu0 0.0
        %354 = vmatprep.subr.mxu0 0.0
        %355 = vmatpush1.xpose.msra.mxu0 0.0
        %356 = vmatprep.subr.mxu0 0.0
        %357 = vmatpush1.xpose.msra.mxu0 0.0
        %358 = vmatprep.subr.mxu0 0.0
        %359 = vmatpush1.xpose.msra.mxu0 0.0
        %360 = vmatprep.subr.mxu0 0.0
        %361 = vmatpush1.xpose.msra.mxu0 0.0
        %362 = vmatprep.subr.mxu0 0.0
        %363 = vmatpush1.xpose.msra.mxu0 0.0
        %364 = vmatprep.subr.mxu0 0.0
        %365 = vmatpush1.xpose.msra.mxu0 0.0
        %366 = vmatprep.subr.mxu0 0.0
        %367 = vmatpush1.xpose.msra.mxu0 0.0
        %368 = vmatprep.subr.mxu0 0.0
        %369 = vmatpush1.xpose.msra.mxu0 0.0
        %370 = vmatprep.subr.mxu0 0.0
        %371 = vmatpush1.xpose.msra.mxu0 0.0
        %372 = vmatprep.subr.mxu0 0.0
        %373 = vmatpush1.xpose.msra.mxu0 0.0
        %374 = vmatprep.subr.mxu0 0.0
        %375 = vmatpush1.xpose.msra.mxu0 0.0
        %376 = vmatprep.subr.mxu0 0.0
        %377 = vmatpush1.xpose.msra.mxu0 0.0
        %378 = vmatprep.subr.mxu0 0.0
        %379 = vmatpush1.xpose.msra.mxu0 0.0
        %380 = vmatprep.subr.mxu0 0.0
        %381 = vmatpush1.xpose.msra.mxu0 0.0
        %382 = vmatprep.subr.mxu0 0.0
        %383 = vmatpush1.xpose.msra.mxu0 0.0
        %384 = vmatprep.subr.mxu0 0.0
        %385 = vmatpush1.xpose.msra.mxu0 0.0
        %386 = vmatprep.subr.mxu0 0.0
        %387 = vmatpush1.xpose.msra.mxu0 0.0
        %388 = vmatprep.subr.mxu0 0.0
        %389 = vmatpush1.xpose.msra.mxu0 0.0
        %390 = vmatprep.subr.mxu0 0.0
        %391 = vmatpush1.xpose.msra.mxu0 0.0
        %392 = vmatprep.subr.mxu0 0.0
        %393 = vmatpush1.xpose.msra.mxu0 0.0
        %394 = vmatprep.subr.mxu0 0.0
        %395 = vmatpush1.xpose.msra.mxu0 0.0
        %396 = vmatprep.subr.mxu0 0.0
        %397 = vmatpush1.xpose.msra.mxu0 0.0
        %398 = vmatprep.subr.mxu0 0.0
        %399 = vmatpush1.xpose.msra.mxu0 0.0
        %400 = vmatprep.subr.mxu0 0.0
        %401 = vmatpush1.xpose.msra.mxu0 0.0
        %402 = vmatprep.subr.mxu0 0.0
        %403 = vmatpush1.xpose.msra.mxu0 0.0
        %404 = vmatprep.subr.mxu0 0.0
        %405 = vmatpush1.xpose.msra.mxu0 0.0
        %406 = vmatprep.subr.mxu0 0.0
        %407 = vmatpush1.xpose.msra.mxu0 0.0
        %408 = vmatprep.mubr.f32.mxu0 0.0
        %409 = vmatmul.mubr.f32.gmra.mrb[0].mxu0 %v342
        %v410 = vpop.f32.mrb[0].mxu0
        %v411 = vadd.f32 0.0, %v410
        %v412 = vpop.f32.mrb[0].mxu0
        %413 = vdwg.mxu0
        %v414 = vtanh.pop %v338
        %v415 = vtanh.pop %v411
        %v416 = vmul.f32 %v414, 1.442695
        %v417 = vpow.pop %v416
        %v418 = vmul.f32 %v415, 1.442695
        %v419 = vpow.pop %v418
        %vm420 = vcmask 64512
        %v421 = vsel %vm420, %v417, 0.0
        %422 = vadd.xlane.f32.xlu0 %v421
        %v423 = vpop.xlane.xlu0 %422
        %v424 = vsel %vm420, %v419, 0.0
        %425 = vadd.xlane.f32.xlu0 %v424
        %v426 = vpop.xlane.xlu0 %425
        %v428 = vsel %vm420, %v417, 0
        %430 = vmatprep.subr.mxu0 0.0
        %431 = vmatpush1.msra.mxu0 %v259
        %432 = vmatprep.subr.mxu0 0.0
        %433 = vmatpush1.msra.mxu0 0.0
        %434 = vmatprep.subr.mxu0 0.0
        %435 = vmatpush1.msra.mxu0 0.0
        %436 = vmatprep.subr.mxu0 0.0
        %437 = vmatpush1.msra.mxu0 0.0
        %438 = vmatprep.subr.mxu0 0.0
        %439 = vmatpush1.msra.mxu0 0.0
        %440 = vmatprep.subr.mxu0 0.0
        %441 = vmatpush1.msra.mxu0 0.0
        %442 = vmatprep.subr.mxu0 0.0
        %443 = vmatpush1.msra.mxu0 0.0
        %444 = vmatprep.subr.mxu0 0.0
        %445 = vmatpush1.msra.mxu0 0.0
        %446 = vmatprep.subr.mxu0 0.0
        %447 = vmatpush1.msra.mxu0 0.0
        %448 = vmatprep.subr.mxu0 0.0
        %449 = vmatpush1.msra.mxu0 0.0
        %450 = vmatprep.subr.mxu0 0.0
        %451 = vmatpush1.msra.mxu0 0.0
        %452 = vmatprep.subr.mxu0 0.0
        %453 = vmatpush1.msra.mxu0 0.0
        %454 = vmatprep.subr.mxu0 0.0
        %455 = vmatpush1.msra.mxu0 0.0
        %456 = vmatprep.subr.mxu0 0.0
        %457 = vmatpush1.msra.mxu0 0.0
        %458 = vmatprep.subr.mxu0 0.0
        %459 = vmatpush1.msra.mxu0 0.0
        %460 = vmatprep.subr.mxu0 0.0
        %461 = vmatpush1.msra.mxu0 0.0
        %462 = vmatprep.subr.mxu0 0.0
        %463 = vmatpush1.msra.mxu0 0.0
        %464 = vmatprep.subr.mxu0 0.0
        %465 = vmatpush1.msra.mxu0 0.0
        %466 = vmatprep.subr.mxu0 0.0
        %467 = vmatpush1.msra.mxu0 0.0
        %468 = vmatprep.subr.mxu0 0.0
        %469 = vmatpush1.msra.mxu0 0.0
        %470 = vmatprep.subr.mxu0 0.0
        %471 = vmatpush1.msra.mxu0 0.0
        %472 = vmatprep.subr.mxu0 0.0
        %473 = vmatpush1.msra.mxu0 0.0
        %474 = vmatprep.subr.mxu0 0.0
        %475 = vmatpush1.msra.mxu0 0.0
        %476 = vmatprep.subr.mxu0 0.0
        %477 = vmatpush1.msra.mxu0 0.0
        %478 = vmatprep.subr.mxu0 0.0
        %479 = vmatpush1.msra.mxu0 0.0
        %480 = vmatprep.subr.mxu0 0.0
        %481 = vmatpush1.msra.mxu0 0.0
        %482 = vmatprep.subr.mxu0 0.0
        %483 = vmatpush1.msra.mxu0 0.0
        %484 = vmatprep.subr.mxu0 0.0
        %485 = vmatpush1.msra.mxu0 0.0
        %486 = vmatprep.subr.mxu0 0.0
        %487 = vmatpush1.msra.mxu0 0.0
        %488 = vmatprep.subr.mxu0 0.0
        %489 = vmatpush1.msra.mxu0 0.0
        %490 = vmatprep.subr.mxu0 0.0
        %491 = vmatpush1.msra.mxu0 0.0
        %492 = vmatprep.subr.mxu0 0.0
        %493 = vmatpush1.msra.mxu0 0.0
        %494 = vmatprep.mubr.f32.mxu0 0.0
        %495 = vmatmul.mubr.f32.gmra.mrb[0].mxu0 %v428
        %v496 = vpop.f32.mrb[0].mxu0
        %v497 = vadd.f32 0.0, %v496
        %v498 = vpop.f32.mrb[0].mxu0
        %499 = vdwg.mxu0
        %v501 = vsel %vm420, %v419, 0
        %503 = vmatprep.subr.mxu0 0.0
        %504 = vmatpush1.msra.mxu0 %v264
        %505 = vmatprep.subr.mxu0 0.0
        %506 = vmatpush1.msra.mxu0 0.0
        %507 = vmatprep.subr.mxu0 0.0
        %508 = vmatpush1.msra.mxu0 0.0
        %509 = vmatprep.subr.mxu0 0.0
        %510 = vmatpush1.msra.mxu0 0.0
        %511 = vmatprep.subr.mxu0 0.0
        %512 = vmatpush1.msra.mxu0 0.0
        %513 = vmatprep.subr.mxu0 0.0
        %514 = vmatpush1.msra.mxu0 0.0
        %515 = vmatprep.subr.mxu0 0.0
        %516 = vmatpush1.msra.mxu0 0.0
        %517 = vmatprep.subr.mxu0 0.0
        %518 = vmatpush1.msra.mxu0 0.0
        %519 = vmatprep.subr.mxu0 0.0
        %520 = vmatpush1.msra.mxu0 0.0
        %521 = vmatprep.subr.mxu0 0.0
        %522 = vmatpush1.msra.mxu0 0.0
        %523 = vmatprep.subr.mxu0 0.0
        %524 = vmatpush1.msra.mxu0 0.0
        %525 = vmatprep.subr.mxu0 0.0
        %526 = vmatpush1.msra.mxu0 0.0
        %527 = vmatprep.subr.mxu0 0.0
        %528 = vmatpush1.msra.mxu0 0.0
        %529 = vmatprep.subr.mxu0 0.0
        %530 = vmatpush1.msra.mxu0 0.0
        %531 = vmatprep.subr.mxu0 0.0
        %532 = vmatpush1.msra.mxu0 0.0
        %533 = vmatprep.subr.mxu0 0.0
        %534 = vmatpush1.msra.mxu0 0.0
        %535 = vmatprep.subr.mxu0 0.0
        %536 = vmatpush1.msra.mxu0 0.0
        %537 = vmatprep.subr.mxu0 0.0
        %538 = vmatpush1.msra.mxu0 0.0
        %539 = vmatprep.subr.mxu0 0.0
        %540 = vmatpush1.msra.mxu0 0.0
        %541 = vmatprep.subr.mxu0 0.0
        %542 = vmatpush1.msra.mxu0 0.0
        %543 = vmatprep.subr.mxu0 0.0
        %544 = vmatpush1.msra.mxu0 0.0
        %545 = vmatprep.subr.mxu0 0.0
        %546 = vmatpush1.msra.mxu0 0.0
        %547 = vmatprep.subr.mxu0 0.0
        %548 = vmatpush1.msra.mxu0 0.0
        %549 = vmatprep.subr.mxu0 0.0
        %550 = vmatpush1.msra.mxu0 0.0
        %551 = vmatprep.subr.mxu0 0.0
        %552 = vmatpush1.msra.mxu0 0.0
        %553 = vmatprep.subr.mxu0 0.0
        %554 = vmatpush1.msra.mxu0 0.0
        %555 = vmatprep.subr.mxu0 0.0
        %556 = vmatpush1.msra.mxu0 0.0
        %557 = vmatprep.subr.mxu0 0.0
        %558 = vmatpush1.msra.mxu0 0.0
        %559 = vmatprep.subr.mxu0 0.0
        %560 = vmatpush1.msra.mxu0 0.0
        %561 = vmatprep.subr.mxu0 0.0
        %562 = vmatpush1.msra.mxu0 0.0
        %563 = vmatprep.subr.mxu0 0.0
        %564 = vmatpush1.msra.mxu0 0.0
        %565 = vmatprep.subr.mxu0 0.0
        %566 = vmatpush1.msra.mxu0 0.0
        %567 = vmatprep.mubr.f32.mxu0 0.0
        %568 = vmatmul.mubr.f32.gmra.mrb[0].mxu0 %v501
        %v569 = vpop.f32.mrb[0].mxu0
        %v570 = vadd.f32 0.0, %v569
        %v571 = vpop.f32.mrb[0].mxu0
        %572 = vdwg.mxu0
        %v573 = vrcp.pop %v423
        %v574 = vmul.f32 %v497, %v573
        %v575 = vrcp.pop %v426
        %v576 = vmul.f32 %v570, %v575
        %v577 = vtanh.pop %v574
        %v578 = vtanh.pop %v576
        %579 = vst.msk [vmem:[%s164] sm:$0xff] %vm267, %v577
        %580 = vst.msk [vmem:[%s164 + $0x8] sm:$0xff] %vm267, %v578
        %s581 = sand.u32 %s93, 1
        %s582 = scalar_lea.sflag [#allocation3], %s581
        %s583 = sand.u32 %s93, 1
        %s584 = smul.addr %s583, 16
        %s585 = scalar_lea.vmem [#allocation2], %s584
        // Predicated region
        $region33: #{tpu_custom_call.1} parent=31 // pred_check
          %p586 = pneg %p103
        $region34: #{tpu_custom_call.1} parent=31 // pred_check_branch
          %588 = sbr.rel (%p586) target = $region36
        $region35: #{tpu_custom_call.1} parent=31 // pred_region
          %s589 = smul.u32 2, %s17
          %s591 = ssub.s32 256, 256
          %592 = vsyncadd %s582, %s591
          %s593 = smul.addr %s589, 128
          %s594 = scalar_lea.hbm %s3, %s593
          %s595 = sshll.u32 %s585, 4
          %s596 = int_to_ptr.vmem [resolvable:$true] %s595
          %601 = dma.vmem_to_hbm [thread:$0]  %s596, 256, %s594, %s582, 128, 128, 8
        $region36: #{tpu_custom_call.1} parent=31 // pred_fallthru
          _
      $region32: #{tpu_custom_call.1} parent=5 // pred_fallthru
        _
      %p602 = scmp.le.s32.totalorder 2, %s12
      // Predicated region
      $region37: #{tpu_custom_call.1} parent=5 // pred_check
        %p603 = pneg %p602
      $region38: #{tpu_custom_call.1} parent=5 // pred_check_branch
        %605 = sbr.rel (%p603) target = $region40
      $region39: #{tpu_custom_call.1} parent=5 // pred_region
        %s606 = ssub.s32 %s12, 2
        // Predicated region
        $region41: #{tpu_custom_call.1} parent=39 // pred_check
          %p607 = pneg %p109
        $region42: #{tpu_custom_call.1} parent=39 // pred_check_branch
          %609 = sbr.rel (%p607) target = $region44
        $region43: #{tpu_custom_call.1} parent=39 // pred_region
          %s610 = sand.u32 %s94, 1
          %s611 = scalar_lea.sflag [#allocation3], %s610
          %s612 = sand.u32 %s94, 1
          %s613 = smul.addr %s612, 16
          %s614 = scalar_lea.vmem [#allocation2], %s613
          %615 = dma.done %s611, 256
        $region44: #{tpu_custom_call.1} parent=39 // pred_fallthru
          _
      $region40: #{tpu_custom_call.1} parent=5 // pred_fallthru
        _
    $region6: #{tpu_custom_call.1} parent=1 // loop_footer
      %s16 = sadd.s32 1, %s12
    $region7: #{tpu_custom_call.1} parent=1 // loop_footer_branch
      %11 = sbr.rel target = $region3
    $region8: #{tpu_custom_call.1} parent=1 // loop_exit
      _
    %616 = vsyncpa [#allocation3], 1
    %s617 = scalar_lea.sflag [#allocation3], 1
    %618 = vsyncpa %s617, 1

</llo_original>
